<compile_context>
chip_gen: v7x
topology: tpu7x:2x2x1
jax: 0.10.0
libtpu: 0.0.40
codegen_flags: <defaults>
</compile_context>

<pallas_src>
import functools

import jax
import jax.numpy as jnp
from jax import lax
from jax.experimental import pallas as pl
from jax.experimental.pallas import tpu as pltpu


def _hloss_kernel(x_ref, o_ref, acc_ref, *, total_cols, lane_tile, needs_mask):
    j = pl.program_id(0)            # spatial column-block index ("parallel")
    b = pl.program_id(1)            # batch index ("arbitrary", accumulated)
    nb = pl.num_programs(1)

    @pl.when(b == 0)
    def _():
        acc_ref[...] = jnp.zeros_like(acc_ref)

    x = x_ref[0].astype(jnp.float32)                     # (C, lane_tile)

    if needs_mask:
        col = j * lane_tile + lax.broadcasted_iota(jnp.int32, (1, lane_tile), 1)
        valid = col < total_cols                         # (1, lane_tile)
        x = jnp.where(valid, x, 0.0)                     # keep padded cols finite

    # Numerically-stable entropy per spatial column, reduced over C (sublanes).
    m = jnp.max(x, axis=0, keepdims=True)                # (1, T)
    z = x - m
    e = jnp.exp(z)
    s = jnp.sum(e, axis=0, keepdims=True)                # (1, T)
    sum_ez = jnp.sum(e * z, axis=0, keepdims=True)       # (1, T)
    ent = jnp.log(s) - sum_ez / s                        # (1, T) = -sum_c p*log p

    if needs_mask:
        ent = jnp.where(valid, ent, 0.0)                 # zero padded columns

    acc_ref[...] += ent                                  # pure VPU add, no XLU

    @pl.when(b == nb - 1)
    def _():
        total = jnp.sum(acc_ref[...])                    # one cross-lane reduce
        lane = lax.broadcasted_iota(jnp.int32, (1, 128), 1)
        o_ref[...] = jnp.where(lane == 0, total, jnp.float32(0.0))


def hloss_pallas(x_nchw, *, block_bytes=2 * 1024 * 1024):
    """Entropy loss: -(softmax(x, dim=1) * log_softmax(x, dim=1)).sum().

    Returns a float32 scalar (loss is accumulated in f32 regardless of input dtype).
    """
    B, C, H, W = x_nchw.shape
    M = H * W
    x3d = x_nchw.reshape(B, C, M)                        # free reshape, no transpose

    itemsize = jnp.dtype(x_nchw.dtype).itemsize
    if M < 128:
        lane_tile = M                                    # full-dim block is allowed
    else:
        # ~block_bytes per input block (Pallas double-buffers -> 2x in VMEM),
        # lane_tile a multiple of 128 and never larger than M.
        budget_lanes = max(128, (block_bytes // (C * itemsize)) // 128 * 128)
        lane_tile = int(min(budget_lanes, (M // 128) * 128))
    num_j = pl.cdiv(M, lane_tile)
    needs_mask = (M % lane_tile) != 0

    kernel = functools.partial(
        _hloss_kernel, total_cols=M, lane_tile=lane_tile, needs_mask=needs_mask)

    partials = pl.pallas_call(
        kernel,
        out_shape=jax.ShapeDtypeStruct((1, num_j * 128), jnp.float32),
        grid_spec=pltpu.PrefetchScalarGridSpec(
            num_scalar_prefetch=0,
            grid=(num_j, B),
            in_specs=[pl.BlockSpec((1, C, lane_tile), lambda j, b: (b, 0, j))],
            out_specs=pl.BlockSpec((1, 128), lambda j, b: (0, j)),
            scratch_shapes=[pltpu.VMEM((1, lane_tile), jnp.float32)],
        ),
        compiler_params=pltpu.CompilerParams(
            dimension_semantics=("parallel", "arbitrary"),
            vmem_limit_bytes=32 * 1024 * 1024,
        ),
    )(x3d)

    # Each column-block wrote its partial into lane 0 of its (1,128) slot,
    # zeros elsewhere -> a plain tiny sum finishes the reduction.
    return jnp.sum(partials)


def hloss_ref(x_nchw):
    """Pure-JAX reference matching torch semantics."""
    logp = jax.nn.log_softmax(x_nchw, axis=1)
    p = jax.nn.softmax(x_nchw, axis=1)
    return -jnp.sum(p * logp)


if __name__ == "__main__":
    key = jax.random.PRNGKey(0)
    x = jax.random.normal(key, (2, 4, 16, 16), dtype=jnp.float32)

    result = hloss_pallas(x)
    jax.block_until_ready(result)
    ref = hloss_ref(x)
    assert jnp.allclose(result, ref, rtol=1e-5, atol=1e-4), (result, ref)

    # Also exercise the partial-last-block (masked) path.
    x2 = jax.random.normal(jax.random.PRNGKey(1), (2, 3, 10, 30), dtype=jnp.float32)
    r2 = hloss_pallas(x2)
    jax.block_until_ready(r2)
    ref2 = hloss_ref(x2)
    assert jnp.allclose(r2, ref2, rtol=1e-5, atol=1e-4), (r2, ref2)

    print("KERNEL_OK")
</pallas_src>

<mosaic_0001>
module attributes {stable_mosaic.version = 11 : i64} {
  func.func @_hloss_kernel(%arg0: i32, %arg1: i32, %arg2: memref<1x4x256xf32, #tpu.memory_space<vmem>>, %arg3: memref<1x128xf32, #tpu.memory_space<vmem>>, %arg4: memref<1x256xf32, #tpu.memory_space<vmem>>) attributes {dimension_semantics = [#tpu.dimension_semantics<parallel>, #tpu.dimension_semantics<arbitrary>], iteration_bounds = array<i64: 1, 2>, scalar_prefetch = 0 : i64, scratch_operands = 1 : i64, tpu.core_type = #tpu.core_type<tc>, window_params = [{transform_indices = @transform_0, window_bounds = array<i64: 1, 4, 256>}, {transform_indices = @transform_1, window_bounds = array<i64: 1, 128>}]} {
    %c0_i32 = arith.constant 0 : i32
    %0 = arith.cmpi eq, %arg1, %c0_i32 : i32
    %1 = arith.extui %0 : i1 to i32
    %c0_i32_0 = arith.constant 0 : i32
    %2 = arith.cmpi ne, %1, %c0_i32_0 : i32
    scf.if %2 {
      %cst_10 = arith.constant 0.000000e+00 : f32
      %24 = vector.broadcast %cst_10 : f32 to vector<1x256xf32>
      %c0_11 = arith.constant 0 : index
      %c0_12 = arith.constant 0 : index
      %25 = vector.load %arg4[%c0_11, %c0_12] : memref<1x256xf32, #tpu.memory_space<vmem>>, vector<1x256xf32>
      tpu.vector_store %arg4[%c0_11, %c0_12], %24 {strides = array<i32>} : memref<1x256xf32, #tpu.memory_space<vmem>>, vector<1x256xf32>,
    } else {
    }
    %c0 = arith.constant 0 : index
    %c0_1 = arith.constant 0 : index
    %c0_2 = arith.constant 0 : index
    %3 = vector.load %arg2[%c0, %c0_1, %c0_2] : memref<1x4x256xf32, #tpu.memory_space<vmem>>, vector<1x4x256xf32>
    %4 = vector.shape_cast %3 : vector<1x4x256xf32> to vector<4x256xf32>
    %cst = arith.constant dense<0xFF800000> : vector<256xf32>
    %5 = vector.multi_reduction <maximumf>, %4, %cst [0] : vector<4x256xf32> to vector<256xf32>
    %6 = vector.shape_cast %5 : vector<256xf32> to vector<1x256xf32>
    %7 = vector.broadcast %6 : vector<1x256xf32> to vector<4x256xf32>
    %8 = arith.subf %4, %7 : vector<4x256xf32>
    %9 = math.exp %8 : vector<4x256xf32>
    %cst_3 = arith.constant dense<0.000000e+00> : vector<256xf32>
    %10 = vector.multi_reduction <add>, %9, %cst_3 [0] : vector<4x256xf32> to vector<256xf32>
    %11 = vector.shape_cast %10 : vector<256xf32> to vector<1x256xf32>
    %12 = arith.mulf %9, %8 : vector<4x256xf32>
    %cst_4 = arith.constant dense<0.000000e+00> : vector<256xf32>
    %13 = vector.multi_reduction <add>, %12, %cst_4 [0] : vector<4x256xf32> to vector<256xf32>
    %14 = vector.shape_cast %13 : vector<256xf32> to vector<1x256xf32>
    %15 = math.log %11 : vector<1x256xf32>
    %16 = arith.divf %14, %11 : vector<1x256xf32>
    %17 = arith.subf %15, %16 : vector<1x256xf32>
    %c0_5 = arith.constant 0 : index
    %c0_6 = arith.constant 0 : index
    %18 = vector.load %arg4[%c0_5, %c0_6] : memref<1x256xf32, #tpu.memory_space<vmem>>, vector<1x256xf32>
    %19 = arith.addf %18, %17 : vector<1x256xf32>
    %c0_7 = arith.constant 0 : index
    %c0_8 = arith.constant 0 : index
    %20 = vector.load %arg4[%c0_7, %c0_8] : memref<1x256xf32, #tpu.memory_space<vmem>>, vector<1x256xf32>
    tpu.vector_store %arg4[%c0_7, %c0_8], %19 {strides = array<i32>} : memref<1x256xf32, #tpu.memory_space<vmem>>, vector<1x256xf32>,
    %c1_i32 = arith.constant 1 : i32
    %21 = arith.cmpi eq, %arg1, %c1_i32 : i32
    %22 = arith.extui %21 : i1 to i32
    %c0_i32_9 = arith.constant 0 : i32
    %23 = arith.cmpi ne, %22, %c0_i32_9 : i32
    scf.if %23 {
      %c0_10 = arith.constant 0 : index
      %c0_11 = arith.constant 0 : index
      %24 = vector.load %arg4[%c0_10, %c0_11] : memref<1x256xf32, #tpu.memory_space<vmem>>, vector<1x256xf32>
      %25 = vector.shape_cast %24 : vector<1x256xf32> to vector<1x1x256xf32>
      %cst_12 = arith.constant dense<0.000000e+00> : vector<1xf32>
      %26 = vector.multi_reduction <add>, %25, %cst_12 [1, 2] : vector<1x1x256xf32> to vector<1xf32>
      %27 = vector.shape_cast %26 : vector<1xf32> to vector<1x1x1xf32>
      %28 = vector.extract %27[0, 0, 0] : f32 from vector<1x1x1xf32>
      %29 = tpu.iota {dimensions = array<i32: 1>} : vector<1x128xi32>
      %c0_i32_13 = arith.constant 0 : i32
      %30 = vector.broadcast %c0_i32_13 : i32 to vector<1x128xi32>
      %31 = arith.cmpi eq, %29, %30 : vector<1x128xi32>
      %cst_14 = arith.constant 0.000000e+00 : f32
      %32 = vector.broadcast %28 : f32 to vector<1x128xf32>
      %33 = vector.broadcast %cst_14 : f32 to vector<1x128xf32>
      %34 = arith.select %31, %32, %33 : vector<1x128xi1>, vector<1x128xf32>
      %c0_15 = arith.constant 0 : index
      %c0_16 = arith.constant 0 : index
      %35 = vector.load %arg3[%c0_15, %c0_16] : memref<1x128xf32, #tpu.memory_space<vmem>>, vector<1x128xf32>
      tpu.vector_store %arg3[%c0_15, %c0_16], %34 {strides = array<i32>} : memref<1x128xf32, #tpu.memory_space<vmem>>, vector<1x128xf32>,
    } else {
    }
    return
  }
  func.func @transform_0(%arg0: i32, %arg1: i32) -> (i32, i32, i32) {
    %c0_i32 = arith.constant 0 : i32
    %c0_i32_0 = arith.constant 0 : i32
    return %arg1, %c0_i32, %arg0 : i32, i32, i32
  }
  func.func @transform_1(%arg0: i32, %arg1: i32) -> (i32, i32) {
    %c0_i32 = arith.constant 0 : i32
    %c0_i32_0 = arith.constant 0 : i32
    return %c0_i32, %arg0 : i32, i32
  }
}

</mosaic_0001>

<llo_original>
// kernel: tpu_custom_call.1
$region0: #{tpu_custom_call.1}
  #allocation0 [shape = 'u32[]', space=smem, size = 0x4, offset = 0x4, fixed_abs, tag = 'smem constant byte address 0x4 - core index']
  #allocation1 [shape = 'u32[144,128]{1,0:T(1,128)}', space=vmem, size = 0x12000, scoped, tag = 'internal scratch']
  #allocation2 [shape = 'f32[1,256]{1,0:T(1,128)}', space=vmem, size = 0x400, scoped, tag = 'scratch operand']
  %s0 = inlined_call_operand.hbm [shape: f32[2,4,256], index: 0, kind: input, shape index: {}]
  %s1 = inlined_call_operand.hbm [shape: f32[1,128], index: 1, kind: output, shape index: {}]
  %s2 = sld [smem:[#allocation0]]
  $region49: #{tpu_custom_call.1} parent=0
    _
  %s4 = ssub.s32 1, %s2
  %s5 = scalar_select 0, %s4, %s2
  $region1: #{tpu_custom_call.1} parent=0
    #allocation3 [shape = 'u8[8192]{0}', space=vmem, size = 0x2000, scoped, tag = 'input window, operand 0']
    #allocation4 [shape = 's32[2]{0}', space=sflag, size = 0x8, scoped, tag = 'scoped memory for tpu_custom_call.1']
    #allocation5 [shape = 's32[2]{0}', space=sflag, size = 0x8, scoped, tag = 'scoped memory for tpu_custom_call.1']
    #allocation6 [shape = 'u8[512]{0}', space=vmem, size = 0x400, scoped, tag = 'output window, operand 0, single buffered']
    %6 = vsyncpa [#allocation4], 0
    %s7 = scalar_lea.sflag [#allocation4], 1
    %8 = vsyncpa %s7, 0
    %9 = vsyncpa [#allocation5], 0
    loop: start=0, step=1, limit=4
    $region2: #{tpu_custom_call.1} parent=1 // loop_pre_header
      _
    $region3: #{tpu_custom_call.1} parent=1 // loop_header
      %s11 = sphi 0, %s15
      %p12 = scmp.ge.s32.totalorder %s11, 4
      %s18 = sphi 0, %s30
      %s19 = sphi 0, %s26
      %s20 = sphi 0, %s18
      %s21 = sphi 0, %s19
      %s22 = sphi 0, %s20
      %s23 = sphi 0, %s21
      %s35 = sphi 0, %s37
      %s38 = sphi 0, %s35
      %s39 = sphi 0, %s38
      %s55 = sphi 0, %s39
      %s61 = sphi 0, %s63
      %s64 = sphi 0, %s61
      %s65 = sphi 0, %s64
      %s81 = sphi 0, %s65
    $region4: #{tpu_custom_call.1} parent=1 // loop_header_branch
      %14 = sbr.rel (%p12) target = $region8
    $region5: #{tpu_custom_call.1} parent=1 // loop_body
      %s16 = ssub.s32 %s11, 1
      %s17 = ssub.s32 %s11, 2
      %s24 = sadd.s32 1, %s19
      %p25 = scmp.ge.s32.totalorder %s24, 2
      %s26 = scalar_select %p25, 0, %s24
      %s27 = sadd.s32 1, %s18
      %s28 = scalar_select %p25, %s27, %s18
      %p29 = scmp.ge.s32.totalorder %s28, 1
      %s30 = scalar_select %p29, 0, %s28
      %s31 = ssub.s32 %s19, %s26
      %s32 = ssub.s32 %s18, %s30
      %s33 = sor.u32 %s31, %s32
      %p34 = scmp.eq.s32.totalorder %s33, 0
      %s36 = sadd.s32 %s35, 1
      %s37 = scalar_select %p34, %s35, %s36
      %p40 = pneg %p34
      %p41 = scmp.eq.s32.totalorder %s11, 1
      %p42 = por %p40, %p41
      %p43 = scmp.ne.s32.totalorder %s35, %s38
      %p44 = scmp.eq.s32.totalorder %s11, 0
      %p45 = por %p43, %p44
      %p46 = scmp.ne.s32.totalorder %s35, %s38
      %p47 = scmp.eq.s32.totalorder %s16, 1
      %p48 = por %p46, %p47
      %p49 = scmp.ne.s32.totalorder %s38, %s39
      %p50 = scmp.eq.s32.totalorder %s16, 0
      %p51 = por %p49, %p50
      %p52 = scmp.ne.s32.totalorder %s38, %s39
      %p53 = scmp.eq.s32.totalorder %s17, 1
      %p54 = por %p52, %p53
      %p56 = scmp.ne.s32.totalorder %s39, %s55
      %p57 = scmp.eq.s32.totalorder %s17, 0
      %p58 = por %p56, %p57
      %s59 = ssub.s32 %s18, %s30
      %p60 = scmp.eq.s32.totalorder %s59, 0
      %s62 = sadd.s32 %s61, 1
      %s63 = scalar_select %p60, %s61, %s62
      %p66 = pneg %p60
      %p67 = scmp.eq.s32.totalorder %s11, 1
      %p68 = por %p66, %p67
      %p69 = scmp.ne.s32.totalorder %s61, %s64
      %p70 = scmp.eq.s32.totalorder %s11, 0
      %p71 = por %p69, %p70
      %p72 = scmp.ne.s32.totalorder %s61, %s64
      %p73 = scmp.eq.s32.totalorder %s16, 1
      %p74 = por %p72, %p73
      %p75 = scmp.ne.s32.totalorder %s64, %s65
      %p76 = scmp.eq.s32.totalorder %s16, 0
      %p77 = por %p75, %p76
      %p78 = scmp.ne.s32.totalorder %s64, %s65
      %p79 = scmp.eq.s32.totalorder %s17, 1
      %p80 = por %p78, %p79
      %p82 = scmp.ne.s32.totalorder %s65, %s81
      %p83 = scmp.eq.s32.totalorder %s17, 0
      %p84 = por %p82, %p83
      %p85 = scmp.le.s32.totalorder 1, %s11
      %p86 = scmp.lt.s32.totalorder %s11, 3
      %p87 = pnand %p85, %p86
      %p88 = pneg %p87
      // Predicated region
      $region9: #{tpu_custom_call.1} parent=5 // pred_check
        _
      $region10: #{tpu_custom_call.1} parent=5 // pred_check_branch
        %90 = sbr.rel (%p87) target = $region12
      $region11: #{tpu_custom_call.1} parent=5 // pred_region
        %s91 = ssub.s32 %s11, 1
      $region12: #{tpu_custom_call.1} parent=5 // pred_fallthru
        _
      %p92 = scmp.lt.s32.totalorder %s11, 2
      // Predicated region
      $region13: #{tpu_custom_call.1} parent=5 // pred_check
        %p93 = pneg %p92
      $region14: #{tpu_custom_call.1} parent=5 // pred_check_branch
        %95 = sbr.rel (%p93) target = $region16
      $region15: #{tpu_custom_call.1} parent=5 // pred_region
        // Predicated region
        $region17: #{tpu_custom_call.1} parent=15 // pred_check
          %p96 = pneg %p45
        $region18: #{tpu_custom_call.1} parent=15 // pred_check_branch
          %98 = sbr.rel (%p96) target = $region20
        $region19: #{tpu_custom_call.1} parent=15 // pred_region
          %s99 = sand.u32 %s35, 1
          %s100 = scalar_lea.sflag [#allocation4], %s99
          %s101 = sand.u32 %s35, 1
          %s102 = smul.addr %s101, 8
          %s103 = scalar_lea.vmem [#allocation3], %s102
          %s104 = smul.u32 2, %s18
          %s106 = ssub.s32 128, 128
          %107 = vsyncadd %s100, %s106
          %s108 = smul.addr %s19, 2
          %s109 = sadd.s32 %s104, %s108
          %s110 = smul.addr %s109, 64
          %s111 = scalar_lea.hbm %s0, %s110
          %s113 = sshll.u32 %s103, 4
          %s114 = int_to_ptr.vmem [resolvable:$true] %s113
          %116 = dma.hbm_to_vmem [thread:$0]  %s111, 128, %s114, %s100
        $region20: #{tpu_custom_call.1} parent=15 // pred_fallthru
          _
      $region16: #{tpu_custom_call.1} parent=5 // pred_fallthru
        _
      %p117 = scmp.le.s32.totalorder 1, %s11
      %p118 = scmp.lt.s32.totalorder %s11, 3
      %p119 = pnand %p117, %p118
      %p120 = pneg %p119
      // Predicated region
      $region21: #{tpu_custom_call.1} parent=5 // pred_check
        _
      $region22: #{tpu_custom_call.1} parent=5 // pred_check_branch
        %122 = sbr.rel (%p119) target = $region24
      $region23: #{tpu_custom_call.1} parent=5 // pred_region
        %s123 = ssub.s32 %s11, 1
        %s124 = sand.u32 %s38, 1
        %s125 = scalar_lea.sflag [#allocation4], %s124
        %s126 = sand.u32 %s38, 1
        %s127 = smul.addr %s126, 8
        %s128 = scalar_lea.vmem [#allocation3], %s127
        // Predicated region
        $region25: #{tpu_custom_call.1} parent=23 // pred_check
          %p129 = pneg %p51
        $region26: #{tpu_custom_call.1} parent=23 // pred_check_branch
          %131 = sbr.rel (%p129) target = $region28
        $region27: #{tpu_custom_call.1} parent=23 // pred_region
          %132 = dma.done %s125, 128
        $region28: #{tpu_custom_call.1} parent=23 // pred_fallthru
          _
        %s133 = sand.u32 %s38, 1
        %s134 = scalar_lea.sflag [#allocation4], %s133
        %s135 = sand.u32 %s38, 1
        %s136 = smul.addr %s135, 8
        %s137 = scalar_lea.vmem [#allocation3], %s136
        %p138 = pneg %p51
        %p139 = pneg %p48
        %p140 = pneg %p77
        %p141 = pneg %p74
        %s142 = smul.u32 2, %s20
        %p143 = scmp.eq.s32.totalorder %s21, 0
        // Predicated region
        $region29: #{tpu_custom_call.1} parent=23 // pred_check
          %p144 = pneg %p143
        $region30: #{tpu_custom_call.1} parent=23 // pred_check_branch
          %146 = sbr.rel (%p144) target = $region32
        $region31: #{tpu_custom_call.1} parent=23 // pred_region
          %v147 = vlaneseq
          %vm148 = vcmp.ge.s32.totalorder %v147, 0
          %vm149 = vcmp.lt.s32.totalorder %v147, 256
          %vm150 = vmand %vm148, %vm149
          %151 = vst.msk [vmem:[#allocation2] sm:$0x3] %vm150, 0.0
        $region32: #{tpu_custom_call.1} parent=23 // pred_fallthru
          _
        %v152 = vld [vmem:[%s128] sm:$0xff]
        %v154 = vcombine.high %v152, %v152
        %vm156 = vcmask 1043456
        %v157 = vsel %vm156, %v152, -inf
        %v158 = vrot.slane %v157, 4
        %v159 = vmax.f32 %v157, %v158
        %v160 = vrot.slane %v159, 2
        %v161 = vmax.f32 %v159, %v160
        %v162 = vrot.slane %v161, 1
        %v163 = vmax.f32 %v161, %v162
        %v164 = vsel %vm156, %v154, -inf
        %v165 = vrot.slane %v164, 4
        %v166 = vmax.f32 %v164, %v165
        %v167 = vrot.slane %v166, 2
        %v168 = vmax.f32 %v166, %v167
        %v169 = vrot.slane %v168, 1
        %v170 = vmax.f32 %v168, %v169
        %v173 = vcombine.low %v163, %v170
        %v175 = vsub.f32 %v152, %v173
        %v176 = vmul.f32 %v175, 1.442695
        %v177 = vpow.pop %v176
        %v179 = vcombine.high %v177, %v177
        %v181 = vsel %vm156, %v177, 0.0
        %v182 = vrot.slane %v181, 4
        %v183 = vadd.f32 %v181, %v182
        %v184 = vrot.slane %v183, 2
        %v185 = vadd.f32 %v183, %v184
        %v186 = vrot.slane %v185, 1
        %v187 = vadd.f32 %v185, %v186
        %v188 = vsel %vm156, %v179, 0.0
        %v189 = vrot.slane %v188, 4
        %v190 = vadd.f32 %v188, %v189
        %v191 = vrot.slane %v190, 2
        %v192 = vadd.f32 %v190, %v191
        %v193 = vrot.slane %v192, 1
        %v194 = vadd.f32 %v192, %v193
        %v195 = vmul.f32 %v177, %v175
        %v197 = vcombine.high %v195, %v195
        %v199 = vsel %vm156, %v195, 0.0
        %v200 = vrot.slane %v199, 4
        %v201 = vadd.f32 %v199, %v200
        %v202 = vrot.slane %v201, 2
        %v203 = vadd.f32 %v201, %v202
        %v204 = vrot.slane %v203, 1
        %v205 = vadd.f32 %v203, %v204
        %v206 = vsel %vm156, %v197, 0.0
        %v207 = vrot.slane %v206, 4
        %v208 = vadd.f32 %v206, %v207
        %v209 = vrot.slane %v208, 2
        %v210 = vadd.f32 %v208, %v209
        %v211 = vrot.slane %v210, 1
        %v212 = vadd.f32 %v210, %v211
        %v213 = vlog2.pop %v187
        %v214 = vmul.f32 %v213, 0.6931472
        %v215 = vlog2.pop %v194
        %v216 = vmul.f32 %v215, 0.6931472
        %v217 = vrcp.pop %v187
        %v218 = vmul.f32 %v205, %v217
        %v219 = vrcp.pop %v194
        %v220 = vmul.f32 %v212, %v219
        %v221 = vsub.f32 %v214, %v218
        %v222 = vsub.f32 %v216, %v220
        %v223 = vld [vmem:[#allocation2] sm:$0x3]
        %v226 = vcombine.low %v221, %v222
        %v228 = vunpack.c.l.s4 1966171168
        %v229 = vunpack.c.0.s8 %v228
        %v230 = vlaneseq
        %v231 = vshrl.u32 %v230, 7
        %v232 = vsub.s32 %v229, %v231
        %v233 = vrot.slane %v226, %v232
        %v235 = vunpack.c.l.s4 1966171168
        %v236 = vunpack.c.0.s8 %v235
        %v237 = vlaneseq
        %v238 = vshrl.u32 %v237, 7
        %v239 = vsub.s32 %v236, %v238
        %v240 = vrot.slane %v233, %v239
        %v242 = vadd.f32 %v223, %v240
        %v243 = vlaneseq
        %vm244 = vcmp.ge.s32.totalorder %v243, 0
        %vm245 = vcmp.lt.s32.totalorder %v243, 256
        %vm246 = vmand %vm244, %vm245
        %247 = vst.msk [vmem:[#allocation2] sm:$0x3] %vm246, %v242
        %p248 = scmp.eq.s32.totalorder %s21, 1
        // Predicated region
        $region33: #{tpu_custom_call.1} parent=23 // pred_check
          %p249 = pneg %p248
        $region34: #{tpu_custom_call.1} parent=23 // pred_check_branch
          %251 = sbr.rel (%p249) target = $region36
        $region35: #{tpu_custom_call.1} parent=23 // pred_region
          %v252 = vld [vmem:[#allocation2] sm:$0x3]
          %v254 = vlaneseq
          %v255 = vshrl.u32 %v254, 7
          %v256 = vsub.s32 0, %v255
          %v257 = vrot.slane %v252, %v256
          %v258 = vlaneseq
          %v259 = vshrl.u32 %v258, 7
          %v260 = vsub.s32 1, %v259
          %v261 = vrot.slane %v252, %v260
          %vm264 = vcmask 1040384
          %v265 = vsel %vm264, %v257, 0.0
          %v266 = vsel %vm264, %v261, 0.0
          %v267 = vadd.f32 %v265, %v266
          %268 = vadd.xlane.f32.xlu0 %v267
          %v269 = vpop.xlane.xlu0 %268
          %v270 = vrot.slane %v269, 4
          %v271 = vadd.f32 %v269, %v270
          %v272 = vrot.slane %v271, 2
          %v273 = vadd.f32 %v271, %v272
          %v274 = vrot.slane %v273, 1
          %v275 = vadd.f32 %v273, %v274
          %s276 = vtos %v275
          %v277 = vlaneseq
          %v278 = vand.u32 %v277, 127
          %vm279 = vcmp.eq.s32.totalorder %v278, 0
          %v280 = vstv %s276
          %v281 = vsel %vm279, %v280, 0.0
          %282 = vst [vmem:[#allocation6] sm:$0x1] %v281
        $region36: #{tpu_custom_call.1} parent=23 // pred_fallthru
          _
        // Predicated region
        $region37: #{tpu_custom_call.1} parent=23 // pred_check
          %p283 = pneg %p74
        $region38: #{tpu_custom_call.1} parent=23 // pred_check_branch
          %285 = sbr.rel (%p283) target = $region40
        $region39: #{tpu_custom_call.1} parent=23 // pred_region
          %s287 = ssub.s32 16, 16
          %288 = vsyncadd [#allocation5], %s287
          %s289 = smul.addr %s20, 16
          %s290 = scalar_lea.hbm %s1, %s289
          %s292 = sshll.u32 [#allocation6], 4
          %s293 = int_to_ptr.vmem [resolvable:$true] %s292
          %295 = dma.vmem_to_hbm [thread:$0]  %s293, 16, %s290, [#allocation5]
        $region40: #{tpu_custom_call.1} parent=23 // pred_fallthru
          _
        // Predicated region
        $region41: #{tpu_custom_call.1} parent=23 // pred_check
          %p296 = pneg %p74
        $region42: #{tpu_custom_call.1} parent=23 // pred_check_branch
          %298 = sbr.rel (%p296) target = $region44
        $region43: #{tpu_custom_call.1} parent=23 // pred_region
          %299 = dma.done [#allocation5], 16
        $region44: #{tpu_custom_call.1} parent=23 // pred_fallthru
          _
      $region24: #{tpu_custom_call.1} parent=5 // pred_fallthru
        _
      %p300 = scmp.le.s32.totalorder 2, %s11
      // Predicated region
      $region45: #{tpu_custom_call.1} parent=5 // pred_check
        %p301 = pneg %p300
      $region46: #{tpu_custom_call.1} parent=5 // pred_check_branch
        %303 = sbr.rel (%p301) target = $region48
      $region47: #{tpu_custom_call.1} parent=5 // pred_region
        %s304 = ssub.s32 %s11, 2
      $region48: #{tpu_custom_call.1} parent=5 // pred_fallthru
        _
    $region6: #{tpu_custom_call.1} parent=1 // loop_footer
      %s15 = sadd.s32 1, %s11
    $region7: #{tpu_custom_call.1} parent=1 // loop_footer_branch
      %10 = sbr.rel target = $region3
    $region8: #{tpu_custom_call.1} parent=1 // loop_exit
      _
    %305 = vsyncpa [#allocation4], 1
    %s306 = scalar_lea.sflag [#allocation4], 1
    %307 = vsyncpa %s306, 1
    %308 = vsyncpa [#allocation5], 1
    %s309 = scalar_lea.sflag [#allocation5], 1
    %310 = vsyncpa %s309, 1

</llo_original>
